<compile_context>
chip_gen: v7x
topology: tpu7x:2x2x1
jax: 0.10.0
libtpu: 0.0.40
codegen_flags: <defaults>
</compile_context>

<pallas_src>
import math
import functools

import jax
import jax.numpy as jnp
from jax.experimental import pallas as pl
from jax.experimental.pallas import tpu as pltpu


def _round_up(x: int, m: int) -> int:
    return (x + m - 1) // m * m


def _pick_divisor_tile(dim: int, candidates) -> int:
    """Largest candidate that evenly divides `dim`; else the full dim."""
    for c in candidates:
        if dim % c == 0:
            return c
    return dim


def _self_intermediate_kernel(x_ref, w_ref, b_ref, o_ref, acc_ref):
    # x_ref: (tm, tk), w_ref: (tk, tn), b_ref: (1, tn), o_ref: (tm, tn)
    # acc_ref: (tm, tn) f32 scratch, resident across the K grid axis.
    k = pl.program_id(2)

    @pl.when(k == 0)
    def _():
        acc_ref[...] = jnp.zeros_like(acc_ref)

    acc_ref[...] += jnp.dot(
        x_ref[...], w_ref[...], preferred_element_type=jnp.float32
    )

    @pl.when(k == pl.num_programs(2) - 1)
    def _():
        y = acc_ref[...] + b_ref[...].astype(jnp.float32)
        # Exact (erf-based) GELU, matching PyTorch's ACT2FN['gelu'] / F.gelu.
        g = 0.5 * y * (1.0 + jax.lax.erf(y * (1.0 / math.sqrt(2.0))))
        o_ref[...] = g.astype(o_ref.dtype)


@functools.partial(jax.jit, static_argnames=("tile_m", "tile_n", "tile_k"))
def self_intermediate(hidden_states, weight_t, bias, *,
                      tile_m=None, tile_n=None, tile_k=None):
    """hidden_states: (B, S, H); weight_t: (H, I); bias: (I,) -> (B, S, I)."""
    B, S, H = hidden_states.shape
    I = weight_t.shape[1]
    M = B * S
    x2d = hidden_states.reshape(M, H)
    bias2d = bias.reshape(1, I)

    # ---- dtype-aware tile selection -------------------------------------
    dtype = hidden_states.dtype
    itemsize = jnp.dtype(dtype).itemsize
    m_align = 16 if itemsize == 2 else 8

    if tile_m is None:
        # Big enough to feed the MXU / amortize per-step overhead, but never
        # larger than the (aligned) problem size.
        tile_m = min(256, _round_up(M, m_align))
    if tile_n is None:
        # Lane-dense output tile: multiple of 128 when possible.
        tile_n = _pick_divisor_tile(I, (1024, 512, 256, 128))
    if tile_k is None:
        # Keep the full hidden dim resident for small/medium H; split the
        # reduction (K grid axis + accumulator) for large H so VMEM stays
        # bounded independent of H.
        if H <= 2048:
            tile_k = H
        else:
            tile_k = _pick_divisor_tile(H, (2048, 1024, 512, 256, 128))

    grid = (pl.cdiv(M, tile_m), pl.cdiv(I, tile_n), pl.cdiv(H, tile_k))

    # ---- VMEM budget (double-buffered tiles + f32 accumulator) ----------
    vmem_est = (
        2 * tile_m * tile_k * itemsize          # x tile
        + 2 * tile_k * tile_n * itemsize        # w tile
        + 2 * tile_n * itemsize                 # bias tile
        + 2 * tile_m * tile_n * itemsize        # out tile
        + tile_m * tile_n * 4                   # f32 accumulator
    )
    compiler_kwargs = dict(
        dimension_semantics=("parallel", "parallel", "arbitrary"),
    )
    if vmem_est > (16 << 20):
        # Raise the scoped limit (with headroom) only when the tiles need it.
        compiler_kwargs["vmem_limit_bytes"] = int(min(2 * vmem_est, 96 << 20))

    cost = pl.CostEstimate(
        flops=2 * M * H * I,
        transcendentals=M * I,  # erf in the GELU epilogue
        bytes_accessed=(M * H + H * I + I + M * I) * itemsize,
    )

    out = pl.pallas_call(
        _self_intermediate_kernel,
        out_shape=jax.ShapeDtypeStruct((M, I), dtype),
        grid_spec=pltpu.PrefetchScalarGridSpec(
            num_scalar_prefetch=0,
            grid=grid,
            in_specs=[
                pl.BlockSpec((tile_m, tile_k), lambda i, j, k: (i, k)),  # x
                pl.BlockSpec((tile_k, tile_n), lambda i, j, k: (k, j)),  # W^T
                pl.BlockSpec((1, tile_n),      lambda i, j, k: (0, j)),  # bias
            ],
            out_specs=pl.BlockSpec((tile_m, tile_n), lambda i, j, k: (i, j)),
            scratch_shapes=[pltpu.VMEM((tile_m, tile_n), jnp.float32)],
        ),
        compiler_params=pltpu.CompilerParams(**compiler_kwargs),
        cost_estimate=cost,
    )(x2d, weight_t, bias2d)

    return out.reshape(B, S, I)


def init_params(key, hidden_size, intermediate_size, dtype=jnp.float32):
    """Deterministic init matching nn.Linear defaults (kaiming_uniform a=sqrt(5))."""
    kw, kb = jax.random.split(key)
    bound = 1.0 / math.sqrt(hidden_size)
    # PyTorch weight shape is (out, in); we store its transpose (in, out).
    weight_t = jax.random.uniform(
        kw, (hidden_size, intermediate_size), dtype, minval=-bound, maxval=bound
    )
    bias = jax.random.uniform(
        kb, (intermediate_size,), dtype, minval=-bound, maxval=bound
    )
    return weight_t, bias


if __name__ == "__main__":
    key = jax.random.PRNGKey(0)
    k_x, k_p = jax.random.split(key)

    batch, seq, hidden, intermediate = 2, 8, 32, 128
    hidden_states = jax.random.normal(k_x, (batch, seq, hidden), jnp.float32)
    weight_t, bias = init_params(k_p, hidden, intermediate)

    out = self_intermediate(hidden_states, weight_t, bias)
    out = jax.block_until_ready(out)

    # Reference check in plain JAX (exact erf GELU, same as torch).
    y_ref = hidden_states.reshape(-1, hidden) @ weight_t + bias
    y_ref = 0.5 * y_ref * (1.0 + jax.lax.erf(y_ref / math.sqrt(2.0)))
    y_ref = y_ref.reshape(batch, seq, intermediate)
    assert jnp.allclose(out, y_ref, atol=1e-5, rtol=1e-5), "mismatch vs reference"

    print("KERNEL_OK")
</pallas_src>

<mosaic_0001>
module attributes {stable_mosaic.version = 11 : i64} {
  func.func @_self_intermediate_kernel(%arg0: i32, %arg1: i32, %arg2: i32, %arg3: memref<16x32xf32, #tpu.memory_space<vmem>>, %arg4: memref<32x128xf32, #tpu.memory_space<vmem>>, %arg5: memref<1x128xf32, #tpu.memory_space<vmem>>, %arg6: memref<16x128xf32, #tpu.memory_space<vmem>>, %arg7: memref<16x128xf32, #tpu.memory_space<vmem>>) attributes {dimension_semantics = [#tpu.dimension_semantics<parallel>, #tpu.dimension_semantics<parallel>, #tpu.dimension_semantics<arbitrary>], iteration_bounds = array<i64: 1, 1, 1>, scalar_prefetch = 0 : i64, scratch_operands = 1 : i64, tpu.core_type = #tpu.core_type<tc>, window_params = [{transform_indices = @transform_0, window_bounds = array<i64: 16, 32>}, {transform_indices = @transform_1, window_bounds = array<i64: 32, 128>}, {transform_indices = @transform_2, window_bounds = array<i64: 1, 128>}, {transform_indices = @transform_3, window_bounds = array<i64: 16, 128>}]} {
    %c0_i32 = arith.constant 0 : i32
    %0 = arith.cmpi eq, %arg2, %c0_i32 : i32
    %1 = arith.extui %0 : i1 to i32
    %c0_i32_0 = arith.constant 0 : i32
    %2 = arith.cmpi ne, %1, %c0_i32_0 : i32
    scf.if %2 {
      %cst_10 = arith.constant 0.000000e+00 : f32
      %12 = vector.broadcast %cst_10 : f32 to vector<16x128xf32>
      %c0_11 = arith.constant 0 : index
      %c0_12 = arith.constant 0 : index
      %13 = vector.load %arg7[%c0_11, %c0_12] : memref<16x128xf32, #tpu.memory_space<vmem>>, vector<16x128xf32>
      tpu.vector_store %arg7[%c0_11, %c0_12], %12 {strides = array<i32>} : memref<16x128xf32, #tpu.memory_space<vmem>>, vector<16x128xf32>,
    } else {
    }
    %c0 = arith.constant 0 : index
    %c0_1 = arith.constant 0 : index
    %3 = vector.load %arg7[%c0, %c0_1] : memref<16x128xf32, #tpu.memory_space<vmem>>, vector<16x128xf32>
    %c0_2 = arith.constant 0 : index
    %c0_3 = arith.constant 0 : index
    %4 = vector.load %arg3[%c0_2, %c0_3] : memref<16x32xf32, #tpu.memory_space<vmem>>, vector<16x32xf32>
    %c0_4 = arith.constant 0 : index
    %c0_5 = arith.constant 0 : index
    %5 = vector.load %arg4[%c0_4, %c0_5] : memref<32x128xf32, #tpu.memory_space<vmem>>, vector<32x128xf32>
    %cst = arith.constant dense<0.000000e+00> : vector<16x128xf32>
    %6 = tpu.matmul %4, %5, %cst {dimension_numbers = #tpu.dot_dimension_numbers<[1], [0], [0], [1], [0, 0, 1, 1], [], []>} : vector<16x32xf32>, vector<32x128xf32>, vector<16x128xf32> -> vector<16x128xf32>
    %7 = arith.addf %3, %6 : vector<16x128xf32>
    %c0_6 = arith.constant 0 : index
    %c0_7 = arith.constant 0 : index
    %8 = vector.load %arg7[%c0_6, %c0_7] : memref<16x128xf32, #tpu.memory_space<vmem>>, vector<16x128xf32>
    tpu.vector_store %arg7[%c0_6, %c0_7], %7 {strides = array<i32>} : memref<16x128xf32, #tpu.memory_space<vmem>>, vector<16x128xf32>,
    %c0_i32_8 = arith.constant 0 : i32
    %9 = arith.cmpi eq, %arg2, %c0_i32_8 : i32
    %10 = arith.extui %9 : i1 to i32
    %c0_i32_9 = arith.constant 0 : i32
    %11 = arith.cmpi ne, %10, %c0_i32_9 : i32
    scf.if %11 {
      %c0_10 = arith.constant 0 : index
      %c0_11 = arith.constant 0 : index
      %12 = vector.load %arg7[%c0_10, %c0_11] : memref<16x128xf32, #tpu.memory_space<vmem>>, vector<16x128xf32>
      %c0_12 = arith.constant 0 : index
      %c0_13 = arith.constant 0 : index
      %13 = vector.load %arg5[%c0_12, %c0_13] : memref<1x128xf32, #tpu.memory_space<vmem>>, vector<1x128xf32>
      %14 = vector.broadcast %13 : vector<1x128xf32> to vector<16x128xf32>
      %15 = arith.addf %12, %14 : vector<16x128xf32>
      %cst_14 = arith.constant 5.000000e-01 : f32
      %16 = vector.broadcast %cst_14 : f32 to vector<16x128xf32>
      %17 = arith.mulf %16, %15 : vector<16x128xf32>
      %cst_15 = arith.constant 0.707106769 : f32
      %18 = vector.broadcast %cst_15 : f32 to vector<16x128xf32>
      %19 = arith.mulf %15, %18 : vector<16x128xf32>
      %20 = math.erf %19 : vector<16x128xf32>
      %cst_16 = arith.constant 1.000000e+00 : f32
      %21 = vector.broadcast %cst_16 : f32 to vector<16x128xf32>
      %22 = arith.addf %21, %20 : vector<16x128xf32>
      %23 = arith.mulf %17, %22 : vector<16x128xf32>
      %c0_17 = arith.constant 0 : index
      %c0_18 = arith.constant 0 : index
      %24 = vector.load %arg6[%c0_17, %c0_18] : memref<16x128xf32, #tpu.memory_space<vmem>>, vector<16x128xf32>
      tpu.vector_store %arg6[%c0_17, %c0_18], %23 {strides = array<i32>} : memref<16x128xf32, #tpu.memory_space<vmem>>, vector<16x128xf32>,
    } else {
    }
    return
  }
  func.func @transform_0(%arg0: i32, %arg1: i32, %arg2: i32) -> (i32, i32) {
    %c0_i32 = arith.constant 0 : i32
    return %arg0, %arg2 : i32, i32
  }
  func.func @transform_1(%arg0: i32, %arg1: i32, %arg2: i32) -> (i32, i32) {
    %c0_i32 = arith.constant 0 : i32
    return %arg2, %arg1 : i32, i32
  }
  func.func @transform_2(%arg0: i32, %arg1: i32, %arg2: i32) -> (i32, i32) {
    %c0_i32 = arith.constant 0 : i32
    %c0_i32_0 = arith.constant 0 : i32
    return %c0_i32, %arg1 : i32, i32
  }
  func.func @transform_3(%arg0: i32, %arg1: i32, %arg2: i32) -> (i32, i32) {
    %c0_i32 = arith.constant 0 : i32
    return %arg0, %arg1 : i32, i32
  }
}

</mosaic_0001>

<llo_original>
// kernel: self_intermediate.1
$region0: #{self_intermediate.1}
  #allocation0 [shape = 'u32[]', space=smem, size = 0x4, offset = 0x4, fixed_abs, tag = 'smem constant byte address 0x4 - core index']
  #allocation1 [shape = 'u32[144,128]{1,0:T(1,128)}', space=vmem, size = 0x12000, scoped, tag = 'internal scratch']
  #allocation2 [shape = 'f32[16,128]{1,0:T(8,128)}', space=vmem, size = 0x2000, scoped, tag = 'scratch operand']
  %s0 = inlined_call_operand.hbm [shape: f32[16,32], index: 0, kind: input, shape index: {}]
  %s1 = inlined_call_operand.hbm [shape: f32[32,128], index: 1, kind: input, shape index: {}]
  %s2 = inlined_call_operand.vmem [shape: f32[1,128], index: 2, kind: input, shape index: {}]
  %s3 = inlined_call_operand.hbm [shape: f32[16,128], index: 3, kind: output, shape index: {}]
  %s4 = sld [smem:[#allocation0]]
  $region38: #{self_intermediate.1} parent=0
    _
  %s6 = ssub.s32 1, %s4
  %s7 = scalar_select 0, %s6, %s4
  $region1: #{self_intermediate.1} parent=0
    #allocation3 [shape = 'u8[8192]{0}', space=vmem, size = 0x2000, scoped, tag = 'input window, operand 0, single buffered']
    #allocation4 [shape = 's32[1]{0}', space=sflag, size = 0x4, scoped, tag = 'scoped memory for self_intermediate.1']
    #allocation5 [shape = 's32[1]{0}', space=sflag, size = 0x4, scoped, tag = 'scoped memory for self_intermediate.1']
    #allocation6 [shape = 'u8[16384]{0}', space=vmem, size = 0x4000, scoped, tag = 'input window, operand 1, single buffered']
    #allocation7 [shape = 's32[1]{0}', space=sflag, size = 0x4, scoped, tag = 'scoped memory for self_intermediate.1']
    #allocation8 [shape = 'u8[8192]{0}', space=vmem, size = 0x2000, scoped, tag = 'output window, operand 0, single buffered']
    %8 = vsyncpa [#allocation4], 0
    %9 = vsyncpa [#allocation7], 0
    %10 = vsyncpa [#allocation5], 0
    // Predicated region
    $region2: #{self_intermediate.1} parent=1 // pred_check
      _
    $region3: #{self_intermediate.1} parent=1 // pred_check_branch
      %12 = sbr.rel (0) target = $region5
    $region4: #{self_intermediate.1} parent=1 // pred_region
      %s14 = ssub.s32 256, 256
      %15 = vsyncadd [#allocation4], %s14
      %s16 = sshll.u32 [#allocation3], 4
      %s17 = int_to_ptr.vmem [resolvable:$true] %s16
      %22 = dma.hbm_to_vmem [thread:$0]  %s0, 256, %s17, [#allocation4], 128, 128, 8
    $region5: #{self_intermediate.1} parent=1 // pred_fallthru
      _
    // Predicated region
    $region6: #{self_intermediate.1} parent=1 // pred_check
      _
    $region7: #{self_intermediate.1} parent=1 // pred_check_branch
      %24 = sbr.rel (0) target = $region9
    $region8: #{self_intermediate.1} parent=1 // pred_region
      %s26 = ssub.s32 512, 512
      %27 = vsyncadd [#allocation7], %s26
      %s28 = sshll.u32 [#allocation6], 4
      %s29 = int_to_ptr.vmem [resolvable:$true] %s28
      %34 = dma.hbm_to_vmem [thread:$0]  %s1, 512, %s29, [#allocation7], 128, 128, 8
    $region9: #{self_intermediate.1} parent=1 // pred_fallthru
      _
    // Predicated region
    $region10: #{self_intermediate.1} parent=1 // pred_check
      _
    $region11: #{self_intermediate.1} parent=1 // pred_check_branch
      %36 = sbr.rel (0) target = $region13
    $region12: #{self_intermediate.1} parent=1 // pred_region
      _
    $region13: #{self_intermediate.1} parent=1 // pred_fallthru
      _
    // Predicated region
    $region14: #{self_intermediate.1} parent=1 // pred_check
      _
    $region15: #{self_intermediate.1} parent=1 // pred_check_branch
      %38 = sbr.rel (0) target = $region17
    $region16: #{self_intermediate.1} parent=1 // pred_region
      %39 = dma.done [#allocation4], 256
    $region17: #{self_intermediate.1} parent=1 // pred_fallthru
      _
    // Predicated region
    $region18: #{self_intermediate.1} parent=1 // pred_check
      _
    $region19: #{self_intermediate.1} parent=1 // pred_check_branch
      %41 = sbr.rel (0) target = $region21
    $region20: #{self_intermediate.1} parent=1 // pred_region
      %42 = dma.done [#allocation7], 512
    $region21: #{self_intermediate.1} parent=1 // pred_fallthru
      _
    %p43 = scmp.eq.s32.totalorder 0, 0
    // Predicated region
    $region22: #{self_intermediate.1} parent=1 // pred_check
      %p44 = pneg %p43
    $region23: #{self_intermediate.1} parent=1 // pred_check_branch
      %46 = sbr.rel (%p44) target = $region25
    $region24: #{self_intermediate.1} parent=1 // pred_region
      %47 = vst [vmem:[#allocation2] sm:$0xff] 0.0
      %48 = vst [vmem:[#allocation2 + $0x8] sm:$0xff] 0.0
    $region25: #{self_intermediate.1} parent=1 // pred_fallthru
      _
    %v49 = vld [vmem:[#allocation2] sm:$0xff]
    %v50 = vld [vmem:[#allocation2 + $0x8] sm:$0xff]
    %v51 = vld [vmem:[#allocation3] sm:$0xff]
    %v52 = vld [vmem:[#allocation3 + $0x8] sm:$0xff]
    %v53 = vld [vmem:[#allocation6] sm:$0xff]
    %v54 = vld [vmem:[#allocation6 + $0x8] sm:$0xff]
    %v55 = vld [vmem:[#allocation6 + $0x10] sm:$0xff]
    %v56 = vld [vmem:[#allocation6 + $0x18] sm:$0xff]
    %vm57 = vcmask 261120
    %v59 = vsel %vm57, %v51, 0
    %v62 = vsel %vm57, %v52, 0
    %64 = vmatprep.subr.mxu0 0.0
    %65 = vmatpush1.msra.mxu0 %v53
    %66 = vmatprep.subr.mxu0 0.0
    %67 = vmatpush1.msra.mxu0 %v54
    %68 = vmatprep.subr.mxu0 0.0
    %69 = vmatpush1.msra.mxu0 %v55
    %70 = vmatprep.subr.mxu0 0.0
    %71 = vmatpush1.msra.mxu0 %v56
    %72 = vmatprep.subr.mxu0 0.0
    %73 = vmatpush1.msra.mxu0 0.0
    %74 = vmatprep.subr.mxu0 0.0
    %75 = vmatpush1.msra.mxu0 0.0
    %76 = vmatprep.subr.mxu0 0.0
    %77 = vmatpush1.msra.mxu0 0.0
    %78 = vmatprep.subr.mxu0 0.0
    %79 = vmatpush1.msra.mxu0 0.0
    %80 = vmatprep.subr.mxu0 0.0
    %81 = vmatpush1.msra.mxu0 0.0
    %82 = vmatprep.subr.mxu0 0.0
    %83 = vmatpush1.msra.mxu0 0.0
    %84 = vmatprep.subr.mxu0 0.0
    %85 = vmatpush1.msra.mxu0 0.0
    %86 = vmatprep.subr.mxu0 0.0
    %87 = vmatpush1.msra.mxu0 0.0
    %88 = vmatprep.subr.mxu0 0.0
    %89 = vmatpush1.msra.mxu0 0.0
    %90 = vmatprep.subr.mxu0 0.0
    %91 = vmatpush1.msra.mxu0 0.0
    %92 = vmatprep.subr.mxu0 0.0
    %93 = vmatpush1.msra.mxu0 0.0
    %94 = vmatprep.subr.mxu0 0.0
    %95 = vmatpush1.msra.mxu0 0.0
    %96 = vmatprep.subr.mxu0 0.0
    %97 = vmatpush1.msra.mxu0 0.0
    %98 = vmatprep.subr.mxu0 0.0
    %99 = vmatpush1.msra.mxu0 0.0
    %100 = vmatprep.subr.mxu0 0.0
    %101 = vmatpush1.msra.mxu0 0.0
    %102 = vmatprep.subr.mxu0 0.0
    %103 = vmatpush1.msra.mxu0 0.0
    %104 = vmatprep.subr.mxu0 0.0
    %105 = vmatpush1.msra.mxu0 0.0
    %106 = vmatprep.subr.mxu0 0.0
    %107 = vmatpush1.msra.mxu0 0.0
    %108 = vmatprep.subr.mxu0 0.0
    %109 = vmatpush1.msra.mxu0 0.0
    %110 = vmatprep.subr.mxu0 0.0
    %111 = vmatpush1.msra.mxu0 0.0
    %112 = vmatprep.subr.mxu0 0.0
    %113 = vmatpush1.msra.mxu0 0.0
    %114 = vmatprep.subr.mxu0 0.0
    %115 = vmatpush1.msra.mxu0 0.0
    %116 = vmatprep.subr.mxu0 0.0
    %117 = vmatpush1.msra.mxu0 0.0
    %118 = vmatprep.subr.mxu0 0.0
    %119 = vmatpush1.msra.mxu0 0.0
    %120 = vmatprep.subr.mxu0 0.0
    %121 = vmatpush1.msra.mxu0 0.0
    %122 = vmatprep.subr.mxu0 0.0
    %123 = vmatpush1.msra.mxu0 0.0
    %124 = vmatprep.subr.mxu0 0.0
    %125 = vmatpush1.msra.mxu0 0.0
    %126 = vmatprep.subr.mxu0 0.0
    %127 = vmatpush1.msra.mxu0 0.0
    %128 = vmatprep.mubr.f32.mxu0 0.0
    %129 = vmatmul.mubr.f32.gmra.mrb[0].mxu0 %v59
    %v130 = vpop.f32.mrb[0].mxu0
    %v131 = vadd.f32 0.0, %v130
    %v132 = vpop.f32.mrb[0].mxu0
    %133 = vmatprep.mubr.f32.mxu0 0.0
    %134 = vmatmul.mubr.f32.gmra.mrb[0].mxu0 %v62
    %v135 = vpop.f32.mrb[0].mxu0
    %v136 = vadd.f32 0.0, %v135
    %v137 = vpop.f32.mrb[0].mxu0
    %138 = vdwg.mxu0
    %v139 = vadd.f32 %v49, %v131
    %v140 = vadd.f32 %v50, %v136
    %141 = vst [vmem:[#allocation2] sm:$0xff] %v139
    %142 = vst [vmem:[#allocation2 + $0x8] sm:$0xff] %v140
    // Predicated region
    $region26: #{self_intermediate.1} parent=1 // pred_check
      %p143 = pneg %p43
    $region27: #{self_intermediate.1} parent=1 // pred_check_branch
      %145 = sbr.rel (%p143) target = $region29
    $region28: #{self_intermediate.1} parent=1 // pred_region
      %v146 = vld [vmem:[#allocation2] sm:$0xff]
      %v147 = vld [vmem:[#allocation2 + $0x8] sm:$0xff]
      %v148 = vld [vmem:[%s2] sm:$0x1]
      %v150 = vlaneseq
      %v151 = vshrl.u32 %v150, 7
      %v152 = vsub.s32 0, %v151
      %v153 = vrot.slane %v148, %v152
      %v155 = vadd.f32 %v146, %v153
      %v156 = vadd.f32 %v147, %v153
      %v157 = vmul.f32 %v155, 0.5
      %v158 = vmul.f32 %v156, 0.5
      %v159 = vmul.f32 %v155, 0.70710677
      %v160 = vmul.f32 %v156, 0.70710677
      %v161 = verf.f32.pop %v159
      %v162 = verf.f32.pop %v160
      %v163 = vadd.f32 %v161, 1.0
      %v164 = vadd.f32 %v162, 1.0
      %v165 = vmul.f32 %v157, %v163
      %v166 = vmul.f32 %v158, %v164
      %167 = vst [vmem:[#allocation8] sm:$0xff] %v165
      %168 = vst [vmem:[#allocation8 + $0x8] sm:$0xff] %v166
    $region29: #{self_intermediate.1} parent=1 // pred_fallthru
      _
    // Predicated region
    $region30: #{self_intermediate.1} parent=1 // pred_check
      _
    $region31: #{self_intermediate.1} parent=1 // pred_check_branch
      %170 = sbr.rel (0) target = $region33
    $region32: #{self_intermediate.1} parent=1 // pred_region
      %s172 = ssub.s32 256, 256
      %173 = vsyncadd [#allocation5], %s172
      %s174 = sshll.u32 [#allocation8], 4
      %s175 = int_to_ptr.vmem [resolvable:$true] %s174
      %180 = dma.vmem_to_hbm [thread:$0]  %s175, 256, %s3, [#allocation5], 128, 128, 8
    $region33: #{self_intermediate.1} parent=1 // pred_fallthru
      _
    // Predicated region
    $region34: #{self_intermediate.1} parent=1 // pred_check
      _
    $region35: #{self_intermediate.1} parent=1 // pred_check_branch
      %182 = sbr.rel (0) target = $region37
    $region36: #{self_intermediate.1} parent=1 // pred_region
      %183 = dma.done [#allocation5], 256
    $region37: #{self_intermediate.1} parent=1 // pred_fallthru
      _
    %184 = vsyncpa [#allocation4], 1
    %185 = vsyncpa [#allocation7], 1
    %186 = vsyncpa [#allocation5], 1

</llo_original>
